<compile_context>
chip_gen: v7x
topology: tpu7x:2x2x1
jax: 0.10.0
libtpu: 0.0.40
codegen_flags: <defaults>
</compile_context>

<pallas_src>
import jax
import jax.numpy as jnp
from jax import lax
from jax.experimental import pallas as pl
from jax.experimental.pallas import tpu as pltpu


# ---------------------------------------------------------------------------
# Parameter-slab layout (row offsets aligned to 16-row tile boundaries)
# ---------------------------------------------------------------------------
OUT_DIMS = (50, 20, 10, 1)     # fc1..fc4 output features
IN_DIMS = (7, 50, 20, 10)      # fc1..fc4 input features
ROW_OFF = (0, 64, 96, 112)     # row offset of each W_i / b_i inside the slabs
SLAB_ROWS = 128                # multiple of 16 (aligned for f32 and bf16 tiling)
SLAB_COLS = 56                 # >= max(IN_DIMS)=50, multiple of 8
MAX_BLOCK_B = 8192             # keep per-step VMEM under v5e's 16 MiB default


def _round_up(n, m):
    return ((n + m - 1) // m) * m


# ---------------------------------------------------------------------------
# Kernel: fused 4-layer MLP on one batch tile, batch on lanes
# ---------------------------------------------------------------------------
def mlp_kernel(x_ref, w_ref, b_ref, o_ref):
    # x_ref: (TB, 7) f32      w_ref: (SLAB_ROWS, SLAB_COLS) f32
    # b_ref: (SLAB_ROWS, 1) f32   o_ref: (1, TB) f32
    x = x_ref[...]                                                   # (TB, 7)

    # fc1 + ReLU.  Contract the feature axis of BOTH operands (w1 @ x.T):
    # the batch lands on the lane axis from here on, no wrapper transpose.
    w1 = w_ref[ROW_OFF[0]:ROW_OFF[0] + OUT_DIMS[0], 0:IN_DIMS[0]]    # (50, 7)
    b1 = b_ref[ROW_OFF[0]:ROW_OFF[0] + OUT_DIMS[0], :]               # (50, 1)
    h = lax.dot_general(w1, x, (((1,), (1,)), ((), ())),
                        preferred_element_type=jnp.float32) + b1     # (50, TB)
    h = jnp.maximum(h, 0.0)

    # fc2 + ReLU
    w2 = w_ref[ROW_OFF[1]:ROW_OFF[1] + OUT_DIMS[1], 0:IN_DIMS[1]]    # (20, 50)
    b2 = b_ref[ROW_OFF[1]:ROW_OFF[1] + OUT_DIMS[1], :]
    h = jnp.dot(w2, h, preferred_element_type=jnp.float32) + b2      # (20, TB)
    h = jnp.maximum(h, 0.0)

    # fc3 + ReLU
    w3 = w_ref[ROW_OFF[2]:ROW_OFF[2] + OUT_DIMS[2], 0:IN_DIMS[2]]    # (10, 20)
    b3 = b_ref[ROW_OFF[2]:ROW_OFF[2] + OUT_DIMS[2], :]
    h = jnp.dot(w3, h, preferred_element_type=jnp.float32) + b3      # (10, TB)
    h = jnp.maximum(h, 0.0)

    # fc4 (no activation)
    w4 = w_ref[ROW_OFF[3]:ROW_OFF[3] + OUT_DIMS[3], 0:IN_DIMS[3]]    # (1, 10)
    b4 = b_ref[ROW_OFF[3]:ROW_OFF[3] + OUT_DIMS[3], :]
    out = jnp.dot(w4, h, preferred_element_type=jnp.float32) + b4    # (1, TB)

    o_ref[...] = out.astype(o_ref.dtype)


# ---------------------------------------------------------------------------
# Wrapper
# ---------------------------------------------------------------------------
def pack_params(params):
    """Pack w1..w4 (out,in) into one f32 slab and b1..b4 into one f32 column."""
    w_slab = jnp.zeros((SLAB_ROWS, SLAB_COLS), jnp.float32)
    b_slab = jnp.zeros((SLAB_ROWS, 1), jnp.float32)
    for i, (off, out_d, in_d) in enumerate(zip(ROW_OFF, OUT_DIMS, IN_DIMS), start=1):
        w_slab = w_slab.at[off:off + out_d, :in_d].set(params[f"w{i}"])
        b_slab = b_slab.at[off:off + out_d, 0].set(params[f"b{i}"])
    return w_slab, b_slab


def net_forward(x, w_slab, b_slab, *, block_b=4096):
    """Fused MLP forward.

    x: (B, 7) float32 -> returns (B, 1) float32.
    block_b: batch tile on the lane axis (multiple of 128, capped at 8192).
    """
    B = x.shape[0]
    Bp = _round_up(B, 128)
    TB = min(block_b, MAX_BLOCK_B, Bp)
    # v7x has 2 TensorCores: make sure the "parallel" grid has >= 2 steps
    # whenever a half-size tile is still lane-dense (>= 128 lanes).
    if Bp // TB < 2 and Bp >= 256:
        TB = _round_up(Bp // 2, 128)
    grid = (pl.cdiv(B, TB),)   # ragged tail tile handled by Pallas masking

    flops = 2 * sum(i * o for i, o in zip(IN_DIMS, OUT_DIMS)) * B     # 3120*B
    bytes_accessed = (x.size + B) * 4 + (w_slab.size + b_slab.size) * 4

    out_t = pl.pallas_call(
        mlp_kernel,
        out_shape=jax.ShapeDtypeStruct((1, B), jnp.float32),
        grid_spec=pltpu.PrefetchScalarGridSpec(
            num_scalar_prefetch=0,
            grid=grid,
            in_specs=[
                pl.BlockSpec((TB, 7), lambda i: (i, 0)),                 # x tile
                pl.BlockSpec((SLAB_ROWS, SLAB_COLS), lambda i: (0, 0)),  # weights (resident)
                pl.BlockSpec((SLAB_ROWS, 1), lambda i: (0, 0)),          # biases (resident)
            ],
            out_specs=pl.BlockSpec((1, TB), lambda i: (0, i)),
        ),
        compiler_params=pltpu.CompilerParams(
            dimension_semantics=("parallel",)),
        cost_estimate=pl.CostEstimate(
            flops=flops, transcendentals=0, bytes_accessed=bytes_accessed),
    )(x.astype(jnp.float32), w_slab, b_slab)

    return out_t.reshape(B, 1)


# ---------------------------------------------------------------------------
# Parameter init (PyTorch nn.Linear convention: W is (out, in), b is (out,))
# and pure-JAX f32 reference.
# ---------------------------------------------------------------------------
def init_params(key):
    params = {}
    keys = jax.random.split(key, 2 * len(OUT_DIMS))
    for i, (fan_out, fan_in) in enumerate(zip(OUT_DIMS, IN_DIMS)):
        bound = 1.0 / jnp.sqrt(fan_in)   # PyTorch default uniform bound
        wk, bk = keys[2 * i], keys[2 * i + 1]
        params[f"w{i+1}"] = jax.random.uniform(
            wk, (fan_out, fan_in), jnp.float32, -bound, bound)
        params[f"b{i+1}"] = jax.random.uniform(
            bk, (fan_out,), jnp.float32, -bound, bound)
    return params


def reference_forward(x, params):
    h = jnp.maximum(x @ params["w1"].T + params["b1"], 0.0)
    h = jnp.maximum(h @ params["w2"].T + params["b2"], 0.0)
    h = jnp.maximum(h @ params["w3"].T + params["b3"], 0.0)
    return h @ params["w4"].T + params["b4"]


if __name__ == "__main__":
    key = jax.random.PRNGKey(0)
    pkey, xkey = jax.random.split(key)

    params = init_params(pkey)
    w_slab, b_slab = pack_params(params)

    # Exercise: single partial tile (B=8), multi-step grid with ragged tail
    # (B=200, blk=128), and the TB-halving path for >=2 grid steps (B=1000).
    for B, blk in ((8, 4096), (200, 128), (1000, 4096)):
        x = jax.random.normal(jax.random.fold_in(xkey, B), (B, 7), jnp.float32)
        out = jax.block_until_ready(net_forward(x, w_slab, b_slab, block_b=blk))
        ref = reference_forward(x, params)
        assert out.shape == (B, 1), out.shape
        assert jnp.allclose(out, ref, atol=5e-3, rtol=5e-3), (
            f"mismatch vs reference at B={B}: "
            f"max|diff|={float(jnp.max(jnp.abs(out - ref)))}")

    print("KERNEL_OK")
</pallas_src>

<mosaic_0001>
module attributes {stable_mosaic.version = 11 : i64} {
  func.func @mlp_kernel(%arg0: i32, %arg1: memref<128x7xf32, #tpu.memory_space<vmem>>, %arg2: memref<128x56xf32, #tpu.memory_space<vmem>>, %arg3: memref<128x1xf32, #tpu.memory_space<vmem>>, %arg4: memref<1x128xf32, #tpu.memory_space<vmem>>) attributes {dimension_semantics = [#tpu.dimension_semantics<parallel>], iteration_bounds = array<i64: 1>, scalar_prefetch = 0 : i64, scratch_operands = 0 : i64, tpu.core_type = #tpu.core_type<tc>, window_params = [{transform_indices = @transform_0, window_bounds = array<i64: 128, 7>}, {pipeline_mode = #tpu.pipeline_mode<synchronous>, transform_indices = @transform_1, window_bounds = array<i64: 128, 56>}, {pipeline_mode = #tpu.pipeline_mode<synchronous>, transform_indices = @transform_2, window_bounds = array<i64: 128, 1>}, {transform_indices = @transform_3, window_bounds = array<i64: 1, 128>}]} {
    %c0 = arith.constant 0 : index
    %c0_0 = arith.constant 0 : index
    %0 = vector.load %arg1[%c0, %c0_0] : memref<128x7xf32, #tpu.memory_space<vmem>>, vector<128x7xf32>
    %c0_1 = arith.constant 0 : index
    %c0_2 = arith.constant 0 : index
    %1 = vector.load %arg2[%c0_1, %c0_2] : memref<128x56xf32, #tpu.memory_space<vmem>>, vector<50x7xf32>
    %c0_3 = arith.constant 0 : index
    %c0_4 = arith.constant 0 : index
    %2 = vector.load %arg3[%c0_3, %c0_4] : memref<128x1xf32, #tpu.memory_space<vmem>>, vector<50x1xf32>
    %cst = arith.constant dense<0.000000e+00> : vector<50x128xf32>
    %3 = tpu.matmul %1, %0, %cst {dimension_numbers = #tpu.dot_dimension_numbers<[1], [1], [0], [0], [0, 0, 1, 0], [], []>} : vector<50x7xf32>, vector<128x7xf32>, vector<50x128xf32> -> vector<50x128xf32>
    %4 = vector.broadcast %2 : vector<50x1xf32> to vector<50x128xf32>
    %5 = arith.addf %3, %4 : vector<50x128xf32>
    %cst_5 = arith.constant 0.000000e+00 : f32
    %6 = vector.broadcast %cst_5 : f32 to vector<50x128xf32>
    %7 = arith.maximumf %5, %6 : vector<50x128xf32>
    %c64 = arith.constant 64 : index
    %c0_6 = arith.constant 0 : index
    %8 = vector.load %arg2[%c64, %c0_6] : memref<128x56xf32, #tpu.memory_space<vmem>>, vector<20x50xf32>
    %c64_7 = arith.constant 64 : index
    %c0_8 = arith.constant 0 : index
    %9 = vector.load %arg3[%c64_7, %c0_8] : memref<128x1xf32, #tpu.memory_space<vmem>>, vector<20x1xf32>
    %cst_9 = arith.constant dense<0.000000e+00> : vector<20x128xf32>
    %10 = tpu.matmul %8, %7, %cst_9 {dimension_numbers = #tpu.dot_dimension_numbers<[1], [0], [0], [1], [0, 0, 1, 1], [], []>} : vector<20x50xf32>, vector<50x128xf32>, vector<20x128xf32> -> vector<20x128xf32>
    %11 = vector.broadcast %9 : vector<20x1xf32> to vector<20x128xf32>
    %12 = arith.addf %10, %11 : vector<20x128xf32>
    %cst_10 = arith.constant 0.000000e+00 : f32
    %13 = vector.broadcast %cst_10 : f32 to vector<20x128xf32>
    %14 = arith.maximumf %12, %13 : vector<20x128xf32>
    %c96 = arith.constant 96 : index
    %c0_11 = arith.constant 0 : index
    %15 = vector.load %arg2[%c96, %c0_11] : memref<128x56xf32, #tpu.memory_space<vmem>>, vector<10x20xf32>
    %c96_12 = arith.constant 96 : index
    %c0_13 = arith.constant 0 : index
    %16 = vector.load %arg3[%c96_12, %c0_13] : memref<128x1xf32, #tpu.memory_space<vmem>>, vector<10x1xf32>
    %cst_14 = arith.constant dense<0.000000e+00> : vector<10x128xf32>
    %17 = tpu.matmul %15, %14, %cst_14 {dimension_numbers = #tpu.dot_dimension_numbers<[1], [0], [0], [1], [0, 0, 1, 1], [], []>} : vector<10x20xf32>, vector<20x128xf32>, vector<10x128xf32> -> vector<10x128xf32>
    %18 = vector.broadcast %16 : vector<10x1xf32> to vector<10x128xf32>
    %19 = arith.addf %17, %18 : vector<10x128xf32>
    %cst_15 = arith.constant 0.000000e+00 : f32
    %20 = vector.broadcast %cst_15 : f32 to vector<10x128xf32>
    %21 = arith.maximumf %19, %20 : vector<10x128xf32>
    %c112 = arith.constant 112 : index
    %c0_16 = arith.constant 0 : index
    %22 = vector.load %arg2[%c112, %c0_16] : memref<128x56xf32, #tpu.memory_space<vmem>>, vector<1x10xf32>
    %c112_17 = arith.constant 112 : index
    %c0_18 = arith.constant 0 : index
    %23 = vector.load %arg3[%c112_17, %c0_18] : memref<128x1xf32, #tpu.memory_space<vmem>>, vector<1x1xf32>
    %cst_19 = arith.constant dense<0.000000e+00> : vector<1x128xf32>
    %24 = tpu.matmul %22, %21, %cst_19 {dimension_numbers = #tpu.dot_dimension_numbers<[1], [0], [0], [1], [0, 0, 1, 1], [], []>} : vector<1x10xf32>, vector<10x128xf32>, vector<1x128xf32> -> vector<1x128xf32>
    %25 = vector.broadcast %23 : vector<1x1xf32> to vector<1x128xf32>
    %26 = arith.addf %24, %25 : vector<1x128xf32>
    %c0_20 = arith.constant 0 : index
    %c0_21 = arith.constant 0 : index
    %27 = vector.load %arg4[%c0_20, %c0_21] : memref<1x128xf32, #tpu.memory_space<vmem>>, vector<1x128xf32>
    tpu.vector_store %arg4[%c0_20, %c0_21], %26 {strides = array<i32>} : memref<1x128xf32, #tpu.memory_space<vmem>>, vector<1x128xf32>,
    return
  }
  func.func @transform_0(%arg0: i32) -> (i32, i32) {
    %c0_i32 = arith.constant 0 : i32
    %c0_i32_0 = arith.constant 0 : i32
    return %arg0, %c0_i32 : i32, i32
  }
  func.func @transform_1(%arg0: i32) -> (i32, i32) {
    %c0_i32 = arith.constant 0 : i32
    %c0_i32_0 = arith.constant 0 : i32
    %c0_i32_1 = arith.constant 0 : i32
    return %c0_i32, %c0_i32_0 : i32, i32
  }
  func.func @transform_2(%arg0: i32) -> (i32, i32) {
    %c0_i32 = arith.constant 0 : i32
    %c0_i32_0 = arith.constant 0 : i32
    %c0_i32_1 = arith.constant 0 : i32
    return %c0_i32, %c0_i32_0 : i32, i32
  }
  func.func @transform_3(%arg0: i32) -> (i32, i32) {
    %c0_i32 = arith.constant 0 : i32
    %c0_i32_0 = arith.constant 0 : i32
    return %c0_i32, %arg0 : i32, i32
  }
}

</mosaic_0001>

<llo_original>
// kernel: tpu_custom_call.1
$region0: #{tpu_custom_call.1}
  #allocation0 [shape = 'u32[]', space=smem, size = 0x4, offset = 0x4, fixed_abs, tag = 'smem constant byte address 0x4 - core index']
  #allocation1 [shape = 'u32[144,128]{1,0:T(1,128)}', space=vmem, size = 0x12000, scoped, tag = 'internal scratch']
  %s0 = inlined_call_operand.vmem [shape: f32[8,7], index: 0, kind: input, shape index: {}]
  %s1 = inlined_call_operand.vmem [shape: f32[128,56], index: 1, kind: input, shape index: {}]
  %s2 = inlined_call_operand.vmem [shape: f32[128,1], index: 2, kind: input, shape index: {}]
  %s3 = inlined_call_operand.hbm [shape: f32[1,8], index: 3, kind: output, shape index: {}]
  %s4 = sld [smem:[#allocation0]]
  $region22: #{tpu_custom_call.1} parent=0
    _
  %s6 = ssub.s32 1, %s4
  %s7 = scalar_select 0, %s6, %s4
  $region1: #{tpu_custom_call.1} parent=0
    #allocation2 [shape = 'u8[512]{0}', space=vmem, size = 0x400, scoped, tag = 'output window, operand 0, single buffered']
    #allocation3 [shape = 's32[1]{0}', space=sflag, size = 0x4, scoped, tag = 'scoped memory for tpu_custom_call.1']
    %8 = vsyncpa [#allocation3], 0
    // Predicated region
    $region2: #{tpu_custom_call.1} parent=1 // pred_check
      _
    $region3: #{tpu_custom_call.1} parent=1 // pred_check_branch
      %10 = sbr.rel (0) target = $region5
    $region4: #{tpu_custom_call.1} parent=1 // pred_region
      _
    $region5: #{tpu_custom_call.1} parent=1 // pred_fallthru
      _
    // Predicated region
    $region6: #{tpu_custom_call.1} parent=1 // pred_check
      _
    $region7: #{tpu_custom_call.1} parent=1 // pred_check_branch
      %12 = sbr.rel (0) target = $region9
    $region8: #{tpu_custom_call.1} parent=1 // pred_region
      _
    $region9: #{tpu_custom_call.1} parent=1 // pred_fallthru
      _
    // Predicated region
    $region10: #{tpu_custom_call.1} parent=1 // pred_check
      _
    $region11: #{tpu_custom_call.1} parent=1 // pred_check_branch
      %14 = sbr.rel (0) target = $region13
    $region12: #{tpu_custom_call.1} parent=1 // pred_region
      _
    $region13: #{tpu_custom_call.1} parent=1 // pred_fallthru
      _
    %v15 = vld [vmem:[%s0] sm:$0xff]
    %v16 = vld [vmem:[%s0 + $0x8] sm:$0xff]
    %v17 = vld [vmem:[%s0 + $0x10] sm:$0xff]
    %v18 = vld [vmem:[%s0 + $0x18] sm:$0xff]
    %v19 = vld [vmem:[%s0 + $0x20] sm:$0xff]
    %v20 = vld [vmem:[%s0 + $0x28] sm:$0xff]
    %v21 = vld [vmem:[%s0 + $0x30] sm:$0xff]
    %v22 = vld [vmem:[%s0 + $0x38] sm:$0xff]
    %v23 = vld [vmem:[%s0 + $0x40] sm:$0xff]
    %v24 = vld [vmem:[%s0 + $0x48] sm:$0xff]
    %v25 = vld [vmem:[%s0 + $0x50] sm:$0xff]
    %v26 = vld [vmem:[%s0 + $0x58] sm:$0xff]
    %v27 = vld [vmem:[%s0 + $0x60] sm:$0xff]
    %v28 = vld [vmem:[%s0 + $0x68] sm:$0xff]
    %v29 = vld [vmem:[%s0 + $0x70] sm:$0xff]
    %v30 = vld [vmem:[%s0 + $0x78] sm:$0xff]
    %v31 = vld [vmem:[%s1] sm:$0xff]
    %v32 = vld [vmem:[%s1 + $0x8] sm:$0xff]
    %v33 = vld [vmem:[%s1 + $0x10] sm:$0xff]
    %v34 = vld [vmem:[%s1 + $0x18] sm:$0xff]
    %v35 = vld [vmem:[%s1 + $0x20] sm:$0xff]
    %v36 = vld [vmem:[%s1 + $0x28] sm:$0xff]
    %v37 = vld [vmem:[%s1 + $0x30] sm:$0x3]
    %v38 = vld [vmem:[%s2] sm:$0xff]
    %v39 = vld [vmem:[%s2 + $0x8] sm:$0xff]
    %v40 = vld [vmem:[%s2 + $0x10] sm:$0xff]
    %v41 = vld [vmem:[%s2 + $0x18] sm:$0xff]
    %v42 = vld [vmem:[%s2 + $0x20] sm:$0xff]
    %v43 = vld [vmem:[%s2 + $0x28] sm:$0xff]
    %v44 = vld [vmem:[%s2 + $0x30] sm:$0x3]
    %46 = vset.pattern.permute.xlu0 0
    %47 = vperm.xlu0 %46, %v38
    %v48 = vpop.permute.xlu0 %47
    %51 = vset.pattern.permute.xlu0 0
    %52 = vperm.xlu0 %51, %v39
    %v53 = vpop.permute.xlu0 %52
    %56 = vset.pattern.permute.xlu0 0
    %57 = vperm.xlu0 %56, %v40
    %v58 = vpop.permute.xlu0 %57
    %61 = vset.pattern.permute.xlu0 0
    %62 = vperm.xlu0 %61, %v41
    %v63 = vpop.permute.xlu0 %62
    %66 = vset.pattern.permute.xlu0 0
    %67 = vperm.xlu0 %66, %v42
    %v68 = vpop.permute.xlu0 %67
    %71 = vset.pattern.permute.xlu0 0
    %72 = vperm.xlu0 %71, %v43
    %v73 = vpop.permute.xlu0 %72
    %76 = vset.pattern.permute.xlu0 0
    %77 = vperm.xlu0 %76, %v44
    %v78 = vpop.permute.xlu0 %77
    %vm80 = vcmask 56320
    %v82 = vsel %vm80, %v31, 0
    %v85 = vsel %vm80, %v32, 0
    %v88 = vsel %vm80, %v33, 0
    %v91 = vsel %vm80, %v34, 0
    %v94 = vsel %vm80, %v35, 0
    %v97 = vsel %vm80, %v36, 0
    %v100 = vsel %vm80, %v37, 0
    %v103 = vsel %vm80, %v15, 0
    %v106 = vsel %vm80, %v16, 0
    %v109 = vsel %vm80, %v17, 0
    %v112 = vsel %vm80, %v18, 0
    %v115 = vsel %vm80, %v19, 0
    %v118 = vsel %vm80, %v20, 0
    %v121 = vsel %vm80, %v21, 0
    %v124 = vsel %vm80, %v22, 0
    %v127 = vsel %vm80, %v23, 0
    %v130 = vsel %vm80, %v24, 0
    %v133 = vsel %vm80, %v25, 0
    %v136 = vsel %vm80, %v26, 0
    %v139 = vsel %vm80, %v27, 0
    %v142 = vsel %vm80, %v28, 0
    %v145 = vsel %vm80, %v29, 0
    %v148 = vsel %vm80, %v30, 0
    %150 = vmatprep.subr.mxu0 0.0
    %151 = vmatpush1.xpose.msra.mxu0 %v103
    %152 = vmatprep.subr.mxu0 0.0
    %153 = vmatpush1.xpose.msra.mxu0 %v106
    %154 = vmatprep.subr.mxu0 0.0
    %155 = vmatpush1.xpose.msra.mxu0 %v109
    %156 = vmatprep.subr.mxu0 0.0
    %157 = vmatpush1.xpose.msra.mxu0 %v112
    %158 = vmatprep.subr.mxu0 0.0
    %159 = vmatpush1.xpose.msra.mxu0 %v115
    %160 = vmatprep.subr.mxu0 0.0
    %161 = vmatpush1.xpose.msra.mxu0 %v118
    %162 = vmatprep.subr.mxu0 0.0
    %163 = vmatpush1.xpose.msra.mxu0 %v121
    %164 = vmatprep.subr.mxu0 0.0
    %165 = vmatpush1.xpose.msra.mxu0 %v124
    %166 = vmatprep.subr.mxu0 0.0
    %167 = vmatpush1.xpose.msra.mxu0 %v127
    %168 = vmatprep.subr.mxu0 0.0
    %169 = vmatpush1.xpose.msra.mxu0 %v130
    %170 = vmatprep.subr.mxu0 0.0
    %171 = vmatpush1.xpose.msra.mxu0 %v133
    %172 = vmatprep.subr.mxu0 0.0
    %173 = vmatpush1.xpose.msra.mxu0 %v136
    %174 = vmatprep.subr.mxu0 0.0
    %175 = vmatpush1.xpose.msra.mxu0 %v139
    %176 = vmatprep.subr.mxu0 0.0
    %177 = vmatpush1.xpose.msra.mxu0 %v142
    %178 = vmatprep.subr.mxu0 0.0
    %179 = vmatpush1.xpose.msra.mxu0 %v145
    %180 = vmatprep.subr.mxu0 0.0
    %181 = vmatpush1.xpose.msra.mxu0 %v148
    %182 = vmatprep.subr.mxu0 0.0
    %183 = vmatpush1.xpose.msra.mxu0 0.0
    %184 = vmatprep.subr.mxu0 0.0
    %185 = vmatpush1.xpose.msra.mxu0 0.0
    %186 = vmatprep.subr.mxu0 0.0
    %187 = vmatpush1.xpose.msra.mxu0 0.0
    %188 = vmatprep.subr.mxu0 0.0
    %189 = vmatpush1.xpose.msra.mxu0 0.0
    %190 = vmatprep.subr.mxu0 0.0
    %191 = vmatpush1.xpose.msra.mxu0 0.0
    %192 = vmatprep.subr.mxu0 0.0
    %193 = vmatpush1.xpose.msra.mxu0 0.0
    %194 = vmatprep.subr.mxu0 0.0
    %195 = vmatpush1.xpose.msra.mxu0 0.0
    %196 = vmatprep.subr.mxu0 0.0
    %197 = vmatpush1.xpose.msra.mxu0 0.0
    %198 = vmatprep.subr.mxu0 0.0
    %199 = vmatpush1.xpose.msra.mxu0 0.0
    %200 = vmatprep.subr.mxu0 0.0
    %201 = vmatpush1.xpose.msra.mxu0 0.0
    %202 = vmatprep.subr.mxu0 0.0
    %203 = vmatpush1.xpose.msra.mxu0 0.0
    %204 = vmatprep.subr.mxu0 0.0
    %205 = vmatpush1.xpose.msra.mxu0 0.0
    %206 = vmatprep.subr.mxu0 0.0
    %207 = vmatpush1.xpose.msra.mxu0 0.0
    %208 = vmatprep.subr.mxu0 0.0
    %209 = vmatpush1.xpose.msra.mxu0 0.0
    %210 = vmatprep.subr.mxu0 0.0
    %211 = vmatpush1.xpose.msra.mxu0 0.0
    %212 = vmatprep.subr.mxu0 0.0
    %213 = vmatpush1.xpose.msra.mxu0 0.0
    %214 = vmatprep.mubr.f32.mxu0 0.0
    %215 = vmatmul.mubr.f32.gmra.mrb[0].mxu0 %v82
    %v216 = vpop.f32.mrb[0].mxu0
    %v217 = vadd.f32 %v48, %v216
    %v218 = vpop.f32.mrb[0].mxu0
    %219 = vmatprep.mubr.f32.mxu0 0.0
    %220 = vmatmul.mubr.f32.gmra.mrb[0].mxu0 %v85
    %v221 = vpop.f32.mrb[0].mxu0
    %v222 = vadd.f32 %v53, %v221
    %v223 = vpop.f32.mrb[0].mxu0
    %224 = vmatprep.mubr.f32.mxu0 0.0
    %225 = vmatmul.mubr.f32.gmra.mrb[0].mxu0 %v88
    %v226 = vpop.f32.mrb[0].mxu0
    %v227 = vadd.f32 %v58, %v226
    %v228 = vpop.f32.mrb[0].mxu0
    %229 = vmatprep.mubr.f32.mxu0 0.0
    %230 = vmatmul.mubr.f32.gmra.mrb[0].mxu0 %v91
    %v231 = vpop.f32.mrb[0].mxu0
    %v232 = vadd.f32 %v63, %v231
    %v233 = vpop.f32.mrb[0].mxu0
    %234 = vmatprep.mubr.f32.mxu0 0.0
    %235 = vmatmul.mubr.f32.gmra.mrb[0].mxu0 %v94
    %v236 = vpop.f32.mrb[0].mxu0
    %v237 = vadd.f32 %v68, %v236
    %v238 = vpop.f32.mrb[0].mxu0
    %239 = vmatprep.mubr.f32.mxu0 0.0
    %240 = vmatmul.mubr.f32.gmra.mrb[0].mxu0 %v97
    %v241 = vpop.f32.mrb[0].mxu0
    %v242 = vadd.f32 %v73, %v241
    %v243 = vpop.f32.mrb[0].mxu0
    %244 = vmatprep.mubr.f32.mxu0 0.0
    %245 = vmatmul.mubr.f32.gmra.mrb[0].mxu0 %v100
    %v246 = vpop.f32.mrb[0].mxu0
    %v247 = vadd.f32 %v78, %v246
    %v248 = vpop.f32.mrb[0].mxu0
    %249 = vdwg.mxu0
    %v250 = vmax.f32 %v217, 0.0
    %v251 = vmax.f32 %v222, 0.0
    %v252 = vmax.f32 %v227, 0.0
    %v253 = vmax.f32 %v232, 0.0
    %v254 = vmax.f32 %v237, 0.0
    %v255 = vmax.f32 %v242, 0.0
    %v256 = vmax.f32 %v247, 0.0
    %v257 = vld [vmem:[%s1 + $0x40] sm:$0xff]
    %v258 = vld [vmem:[%s1 + $0x48] sm:$0xff]
    %v259 = vld [vmem:[%s1 + $0x50] sm:$0xf]
    %v260 = vld [vmem:[%s2 + $0x40] sm:$0xff]
    %v261 = vld [vmem:[%s2 + $0x48] sm:$0xff]
    %v262 = vld [vmem:[%s2 + $0x50] sm:$0xf]
    %264 = vset.pattern.permute.xlu0 0
    %265 = vperm.xlu0 %264, %v260
    %v266 = vpop.permute.xlu0 %265
    %269 = vset.pattern.permute.xlu0 0
    %270 = vperm.xlu0 %269, %v261
    %v271 = vpop.permute.xlu0 %270
    %274 = vset.pattern.permute.xlu0 0
    %275 = vperm.xlu0 %274, %v262
    %v276 = vpop.permute.xlu0 %275
    %vm278 = vcmask 408576
    %v280 = vsel %vm278, %v257, 0
    %v283 = vsel %vm278, %v258, 0
    %v286 = vsel %vm278, %v259, 0
    %vm288 = vcmask 1041408
    %v290 = vsel %vm288, %v256, 0
    %292 = vmatprep.subr.mxu0 0.0
    %293 = vmatpush1.msra.mxu0 %v250
    %294 = vmatprep.subr.mxu0 0.0
    %295 = vmatpush1.msra.mxu0 %v251
    %296 = vmatprep.subr.mxu0 0.0
    %297 = vmatpush1.msra.mxu0 %v252
    %298 = vmatprep.subr.mxu0 0.0
    %299 = vmatpush1.msra.mxu0 %v253
    %300 = vmatprep.subr.mxu0 0.0
    %301 = vmatpush1.msra.mxu0 %v254
    %302 = vmatprep.subr.mxu0 0.0
    %303 = vmatpush1.msra.mxu0 %v255
    %304 = vmatprep.subr.mxu0 0.0
    %305 = vmatpush1.msra.mxu0 %v290
    %306 = vmatprep.subr.mxu0 0.0
    %307 = vmatpush1.msra.mxu0 0.0
    %308 = vmatprep.subr.mxu0 0.0
    %309 = vmatpush1.msra.mxu0 0.0
    %310 = vmatprep.subr.mxu0 0.0
    %311 = vmatpush1.msra.mxu0 0.0
    %312 = vmatprep.subr.mxu0 0.0
    %313 = vmatpush1.msra.mxu0 0.0
    %314 = vmatprep.subr.mxu0 0.0
    %315 = vmatpush1.msra.mxu0 0.0
    %316 = vmatprep.subr.mxu0 0.0
    %317 = vmatpush1.msra.mxu0 0.0
    %318 = vmatprep.subr.mxu0 0.0
    %319 = vmatpush1.msra.mxu0 0.0
    %320 = vmatprep.subr.mxu0 0.0
    %321 = vmatpush1.msra.mxu0 0.0
    %322 = vmatprep.subr.mxu0 0.0
    %323 = vmatpush1.msra.mxu0 0.0
    %324 = vmatprep.subr.mxu0 0.0
    %325 = vmatpush1.msra.mxu0 0.0
    %326 = vmatprep.subr.mxu0 0.0
    %327 = vmatpush1.msra.mxu0 0.0
    %328 = vmatprep.subr.mxu0 0.0
    %329 = vmatpush1.msra.mxu0 0.0
    %330 = vmatprep.subr.mxu0 0.0
    %331 = vmatpush1.msra.mxu0 0.0
    %332 = vmatprep.subr.mxu0 0.0
    %333 = vmatpush1.msra.mxu0 0.0
    %334 = vmatprep.subr.mxu0 0.0
    %335 = vmatpush1.msra.mxu0 0.0
    %336 = vmatprep.subr.mxu0 0.0
    %337 = vmatpush1.msra.mxu0 0.0
    %338 = vmatprep.subr.mxu0 0.0
    %339 = vmatpush1.msra.mxu0 0.0
    %340 = vmatprep.subr.mxu0 0.0
    %341 = vmatpush1.msra.mxu0 0.0
    %342 = vmatprep.subr.mxu0 0.0
    %343 = vmatpush1.msra.mxu0 0.0
    %344 = vmatprep.subr.mxu0 0.0
    %345 = vmatpush1.msra.mxu0 0.0
    %346 = vmatprep.subr.mxu0 0.0
    %347 = vmatpush1.msra.mxu0 0.0
    %348 = vmatprep.subr.mxu0 0.0
    %349 = vmatpush1.msra.mxu0 0.0
    %350 = vmatprep.subr.mxu0 0.0
    %351 = vmatpush1.msra.mxu0 0.0
    %352 = vmatprep.subr.mxu0 0.0
    %353 = vmatpush1.msra.mxu0 0.0
    %354 = vmatprep.subr.mxu0 0.0
    %355 = vmatpush1.msra.mxu0 0.0
    %356 = vmatprep.mubr.f32.mxu0 0.0
    %357 = vmatmul.mubr.f32.gmra.mrb[0].mxu0 %v280
    %v358 = vpop.f32.mrb[0].mxu0
    %v359 = vadd.f32 %v266, %v358
    %v360 = vpop.f32.mrb[0].mxu0
    %361 = vmatprep.mubr.f32.mxu0 0.0
    %362 = vmatmul.mubr.f32.gmra.mrb[0].mxu0 %v283
    %v363 = vpop.f32.mrb[0].mxu0
    %v364 = vadd.f32 %v271, %v363
    %v365 = vpop.f32.mrb[0].mxu0
    %366 = vmatprep.mubr.f32.mxu0 0.0
    %367 = vmatmul.mubr.f32.gmra.mrb[0].mxu0 %v286
    %v368 = vpop.f32.mrb[0].mxu0
    %v369 = vadd.f32 %v276, %v368
    %v370 = vpop.f32.mrb[0].mxu0
    %371 = vdwg.mxu0
    %v372 = vmax.f32 %v359, 0.0
    %v373 = vmax.f32 %v364, 0.0
    %v374 = vmax.f32 %v369, 0.0
    %v375 = vld [vmem:[%s1 + $0x60] sm:$0xff]
    %v376 = vld [vmem:[%s1 + $0x68] sm:$0x3]
    %v377 = vld [vmem:[%s2 + $0x60] sm:$0xff]
    %v378 = vld [vmem:[%s2 + $0x68] sm:$0x3]
    %380 = vset.pattern.permute.xlu0 0
    %381 = vperm.xlu0 %380, %v377
    %v382 = vpop.permute.xlu0 %381
    %385 = vset.pattern.permute.xlu0 0
    %386 = vperm.xlu0 %385, %v378
    %v387 = vpop.permute.xlu0 %386
    %vm389 = vcmask 162816
    %v391 = vsel %vm389, %v375, 0
    %v394 = vsel %vm389, %v376, 0
    %vm396 = vcmask 1043456
    %v398 = vsel %vm396, %v374, 0
    %400 = vmatprep.subr.mxu0 0.0
    %401 = vmatpush1.msra.mxu0 %v372
    %402 = vmatprep.subr.mxu0 0.0
    %403 = vmatpush1.msra.mxu0 %v373
    %404 = vmatprep.subr.mxu0 0.0
    %405 = vmatpush1.msra.mxu0 %v398
    %406 = vmatprep.subr.mxu0 0.0
    %407 = vmatpush1.msra.mxu0 0.0
    %408 = vmatprep.subr.mxu0 0.0
    %409 = vmatpush1.msra.mxu0 0.0
    %410 = vmatprep.subr.mxu0 0.0
    %411 = vmatpush1.msra.mxu0 0.0
    %412 = vmatprep.subr.mxu0 0.0
    %413 = vmatpush1.msra.mxu0 0.0
    %414 = vmatprep.subr.mxu0 0.0
    %415 = vmatpush1.msra.mxu0 0.0
    %416 = vmatprep.subr.mxu0 0.0
    %417 = vmatpush1.msra.mxu0 0.0
    %418 = vmatprep.subr.mxu0 0.0
    %419 = vmatpush1.msra.mxu0 0.0
    %420 = vmatprep.subr.mxu0 0.0
    %421 = vmatpush1.msra.mxu0 0.0
    %422 = vmatprep.subr.mxu0 0.0
    %423 = vmatpush1.msra.mxu0 0.0
    %424 = vmatprep.subr.mxu0 0.0
    %425 = vmatpush1.msra.mxu0 0.0
    %426 = vmatprep.subr.mxu0 0.0
    %427 = vmatpush1.msra.mxu0 0.0
    %428 = vmatprep.subr.mxu0 0.0
    %429 = vmatpush1.msra.mxu0 0.0
    %430 = vmatprep.subr.mxu0 0.0
    %431 = vmatpush1.msra.mxu0 0.0
    %432 = vmatprep.subr.mxu0 0.0
    %433 = vmatpush1.msra.mxu0 0.0
    %434 = vmatprep.subr.mxu0 0.0
    %435 = vmatpush1.msra.mxu0 0.0
    %436 = vmatprep.subr.mxu0 0.0
    %437 = vmatpush1.msra.mxu0 0.0
    %438 = vmatprep.subr.mxu0 0.0
    %439 = vmatpush1.msra.mxu0 0.0
    %440 = vmatprep.subr.mxu0 0.0
    %441 = vmatpush1.msra.mxu0 0.0
    %442 = vmatprep.subr.mxu0 0.0
    %443 = vmatpush1.msra.mxu0 0.0
    %444 = vmatprep.subr.mxu0 0.0
    %445 = vmatpush1.msra.mxu0 0.0
    %446 = vmatprep.subr.mxu0 0.0
    %447 = vmatpush1.msra.mxu0 0.0
    %448 = vmatprep.subr.mxu0 0.0
    %449 = vmatpush1.msra.mxu0 0.0
    %450 = vmatprep.subr.mxu0 0.0
    %451 = vmatpush1.msra.mxu0 0.0
    %452 = vmatprep.subr.mxu0 0.0
    %453 = vmatpush1.msra.mxu0 0.0
    %454 = vmatprep.subr.mxu0 0.0
    %455 = vmatpush1.msra.mxu0 0.0
    %456 = vmatprep.subr.mxu0 0.0
    %457 = vmatpush1.msra.mxu0 0.0
    %458 = vmatprep.subr.mxu0 0.0
    %459 = vmatpush1.msra.mxu0 0.0
    %460 = vmatprep.subr.mxu0 0.0
    %461 = vmatpush1.msra.mxu0 0.0
    %462 = vmatprep.subr.mxu0 0.0
    %463 = vmatpush1.msra.mxu0 0.0
    %464 = vmatprep.mubr.f32.mxu0 0.0
    %465 = vmatmul.mubr.f32.gmra.mrb[0].mxu0 %v391
    %v466 = vpop.f32.mrb[0].mxu0
    %v467 = vadd.f32 %v382, %v466
    %v468 = vpop.f32.mrb[0].mxu0
    %469 = vmatprep.mubr.f32.mxu0 0.0
    %470 = vmatmul.mubr.f32.gmra.mrb[0].mxu0 %v394
    %v471 = vpop.f32.mrb[0].mxu0
    %v472 = vadd.f32 %v387, %v471
    %v473 = vpop.f32.mrb[0].mxu0
    %474 = vdwg.mxu0
    %v475 = vmax.f32 %v467, 0.0
    %v476 = vmax.f32 %v472, 0.0
    %v477 = vld [vmem:[%s1 + $0x70] sm:$0x1]
    %v478 = vld [vmem:[%s2 + $0x70] sm:$0x1]
    %480 = vset.pattern.permute.xlu0 0
    %481 = vperm.xlu0 %480, %v478
    %v482 = vpop.permute.xlu0 %481
    %vm484 = vcmask 80896
    %v486 = vsel %vm484, %v477, 0
    %v489 = vsel %vm288, %v476, 0
    %491 = vmatprep.subr.mxu0 0.0
    %492 = vmatpush1.msra.mxu0 %v475
    %493 = vmatprep.subr.mxu0 0.0
    %494 = vmatpush1.msra.mxu0 %v489
    %495 = vmatprep.subr.mxu0 0.0
    %496 = vmatpush1.msra.mxu0 0.0
    %497 = vmatprep.subr.mxu0 0.0
    %498 = vmatpush1.msra.mxu0 0.0
    %499 = vmatprep.subr.mxu0 0.0
    %500 = vmatpush1.msra.mxu0 0.0
    %501 = vmatprep.subr.mxu0 0.0
    %502 = vmatpush1.msra.mxu0 0.0
    %503 = vmatprep.subr.mxu0 0.0
    %504 = vmatpush1.msra.mxu0 0.0
    %505 = vmatprep.subr.mxu0 0.0
    %506 = vmatpush1.msra.mxu0 0.0
    %507 = vmatprep.subr.mxu0 0.0
    %508 = vmatpush1.msra.mxu0 0.0
    %509 = vmatprep.subr.mxu0 0.0
    %510 = vmatpush1.msra.mxu0 0.0
    %511 = vmatprep.subr.mxu0 0.0
    %512 = vmatpush1.msra.mxu0 0.0
    %513 = vmatprep.subr.mxu0 0.0
    %514 = vmatpush1.msra.mxu0 0.0
    %515 = vmatprep.subr.mxu0 0.0
    %516 = vmatpush1.msra.mxu0 0.0
    %517 = vmatprep.subr.mxu0 0.0
    %518 = vmatpush1.msra.mxu0 0.0
    %519 = vmatprep.subr.mxu0 0.0
    %520 = vmatpush1.msra.mxu0 0.0
    %521 = vmatprep.subr.mxu0 0.0
    %522 = vmatpush1.msra.mxu0 0.0
    %523 = vmatprep.subr.mxu0 0.0
    %524 = vmatpush1.msra.mxu0 0.0
    %525 = vmatprep.subr.mxu0 0.0
    %526 = vmatpush1.msra.mxu0 0.0
    %527 = vmatprep.subr.mxu0 0.0
    %528 = vmatpush1.msra.mxu0 0.0
    %529 = vmatprep.subr.mxu0 0.0
    %530 = vmatpush1.msra.mxu0 0.0
    %531 = vmatprep.subr.mxu0 0.0
    %532 = vmatpush1.msra.mxu0 0.0
    %533 = vmatprep.subr.mxu0 0.0
    %534 = vmatpush1.msra.mxu0 0.0
    %535 = vmatprep.subr.mxu0 0.0
    %536 = vmatpush1.msra.mxu0 0.0
    %537 = vmatprep.subr.mxu0 0.0
    %538 = vmatpush1.msra.mxu0 0.0
    %539 = vmatprep.subr.mxu0 0.0
    %540 = vmatpush1.msra.mxu0 0.0
    %541 = vmatprep.subr.mxu0 0.0
    %542 = vmatpush1.msra.mxu0 0.0
    %543 = vmatprep.subr.mxu0 0.0
    %544 = vmatpush1.msra.mxu0 0.0
    %545 = vmatprep.subr.mxu0 0.0
    %546 = vmatpush1.msra.mxu0 0.0
    %547 = vmatprep.subr.mxu0 0.0
    %548 = vmatpush1.msra.mxu0 0.0
    %549 = vmatprep.subr.mxu0 0.0
    %550 = vmatpush1.msra.mxu0 0.0
    %551 = vmatprep.subr.mxu0 0.0
    %552 = vmatpush1.msra.mxu0 0.0
    %553 = vmatprep.subr.mxu0 0.0
    %554 = vmatpush1.msra.mxu0 0.0
    %555 = vmatprep.mubr.f32.mxu0 0.0
    %556 = vmatmul.mubr.f32.gmra.mrb[0].mxu0 %v486
    %v557 = vpop.f32.mrb[0].mxu0
    %v558 = vadd.f32 %v482, %v557
    %v559 = vpop.f32.mrb[0].mxu0
    %560 = vdwg.mxu0
    %561 = vst [vmem:[#allocation2] sm:$0x1] %v558
    // Predicated region
    $region14: #{tpu_custom_call.1} parent=1 // pred_check
      _
    $region15: #{tpu_custom_call.1} parent=1 // pred_check_branch
      %563 = sbr.rel (0) target = $region17
    $region16: #{tpu_custom_call.1} parent=1 // pred_region
      %s565 = ssub.s32 16, 16
      %566 = vsyncadd [#allocation3], %s565
      %s568 = sshll.u32 [#allocation2], 4
      %s569 = int_to_ptr.vmem [resolvable:$true] %s568
      %571 = dma.vmem_to_hbm [thread:$0]  %s569, 16, %s3, [#allocation3]
    $region17: #{tpu_custom_call.1} parent=1 // pred_fallthru
      _
    // Predicated region
    $region18: #{tpu_custom_call.1} parent=1 // pred_check
      _
    $region19: #{tpu_custom_call.1} parent=1 // pred_check_branch
      %573 = sbr.rel (0) target = $region21
    $region20: #{tpu_custom_call.1} parent=1 // pred_region
      %574 = dma.done [#allocation3], 16
    $region21: #{tpu_custom_call.1} parent=1 // pred_fallthru
      _
    %575 = vsyncpa [#allocation3], 1

</llo_original>
